<compile_context>
chip_gen: v7x
topology: tpu7x:2x2x1
jax: 0.10.0
libtpu: 0.0.40
codegen_flags: <defaults>
</compile_context>

<pallas_src>
import functools
import math

import jax
import jax.numpy as jnp
from jax.experimental import pallas as pl
from jax.experimental.pallas import tpu as pltpu


def _iou_loss_kernel(yt_ref, yp_ref, sel_ref, out_ref, *, valid_rows):
    """(tm, 128) lane-dense tiles -> (1, 1, 128) partial sum of IOU.

    Each 128-lane vector row packs 128 // seg original rows (the reduction
    axis is `seg` consecutive lanes).  One MXU matmul against the resident
    block-diagonal 0/1 selector leaves every lane holding its own row's
    segment sum (repeated `seg` times).  Rows past `valid_rows` (from the
    grid's last block overhanging the input) are masked to zero.
    """
    tm = yt_ref.shape[0]
    yt = yt_ref[...].astype(jnp.float32)      # (tm, 128)
    yp = yp_ref[...].astype(jnp.float32)
    sel = sel_ref[...]                        # (128, 128), exact 0/1

    # Note: on v5e the two f32 MXU matmuls can become co-dominant with the
    # DMA; casting the data operands (not sel) to bf16 is an option there.
    inter = jnp.dot(jnp.abs(yt * yp), sel, preferred_element_type=jnp.float32)
    sums = jnp.dot(yt + yp, sel, preferred_element_type=jnp.float32)
    union = sums - inter
    iou = inter * pl.reciprocal(union, approx=True)         # (tm, 128)

    row = pl.program_id(0) * tm + jax.lax.broadcasted_iota(jnp.int32, (tm, 1), 0)
    contrib = jnp.where(row < valid_rows, iou, 0.0)          # (tm, 128)
    out_ref[...] = jnp.sum(contrib, axis=0).reshape(1, 1, 128)


def _pick_tiling():
    """Choose (tile_rows, vmem_limit_bytes) from the chip's VMEM capacity."""
    try:
        vmem_bytes = pltpu.get_tpu_info().vmem_capacity_bytes
    except Exception:  # pragma: no cover - conservative fallback
        vmem_bytes = 64 * 1024 * 1024
    if vmem_bytes >= 100 * 1024 * 1024:
        return 8192, 64 * 1024 * 1024     # v5e / v6e: 128 MiB VMEM
    return 4096, 32 * 1024 * 1024         # v7x: 64 MiB per-TC VMEM


def iou_loss_pallas(y_true, y_pred, *, tm=None):
    """Loss = -mean(1 - IOU) with the IOU reduction over the last axis."""
    assert y_true.shape == y_pred.shape
    assert y_true.ndim >= 1
    out_dtype = jnp.promote_types(y_true.dtype, y_pred.dtype)

    d = y_true.shape[-1]
    m = math.prod(y_true.shape[:-1])          # number of reduced rows

    if d > 128:
        # TODO(synk): last-dim > 128 needs a multi-vector-row segmented
        # reduction; not required by this module (W=16).
        raise NotImplementedError("iou_loss_pallas supports last-dim <= 128")
    if 128 % d != 0:
        # Zero-pad the reduced axis (both inputs) to the next power of two;
        # zeros change neither the intersection nor the two sums.  This is the
        # only path that copies the full inputs.
        seg = 1 << (d - 1).bit_length()
        pad = [(0, 0)] * (y_true.ndim - 1) + [(0, seg - d)]
        y_true = jnp.pad(y_true, pad)
        y_pred = jnp.pad(y_pred, pad)
    else:
        seg = d

    # Lane-dense view: rows are contiguous in memory, so (m, seg) -> (r, 128)
    # is a free reshape (128 is a multiple of seg).
    n = m * seg
    r = pl.cdiv(n, 128)                       # 128-lane rows of valid data
    yt = y_true.reshape(-1)
    yp = y_pred.reshape(-1)
    rem = r * 128 - n
    if rem:
        # Sub-128-element tail pad only (rare).  Dummy entries y_true = 1 /
        # y_pred = 0 give IOU == 0, so they add nothing to sum(IOU).
        yt = jnp.concatenate([yt, jnp.ones((rem,), yt.dtype)])
        yp = jnp.concatenate([yp, jnp.zeros((rem,), yp.dtype)])
    yt2 = yt.reshape(r, 128)
    yp2 = yp.reshape(r, 128)

    if tm is None:
        tm, vmem_limit = _pick_tiling()
    else:
        vmem_limit = 64 * 1024 * 1024
    tm = max(8, (tm // 8) * 8)
    tm_eff = min(tm, ((r + 7) // 8) * 8)
    if r > 8 and pl.cdiv(r, tm_eff) < 2:
        # Ensure >= 2 grid steps so v7x's second TensorCore gets work.
        tm_eff = ((pl.cdiv(r, 2) + 7) // 8) * 8
    num_tiles = pl.cdiv(r, tm_eff)

    # Block-diagonal 0/1 selector: sel[k, j] = 1 iff k // seg == j // seg.
    # Built once here; constant index_map keeps it resident in VMEM.
    lane = jnp.arange(128, dtype=jnp.int32)
    sel = (lane[:, None] // seg == lane[None, :] // seg).astype(jnp.float32)

    partials = pl.pallas_call(
        functools.partial(_iou_loss_kernel, valid_rows=r),
        out_shape=jax.ShapeDtypeStruct((num_tiles, 1, 128), jnp.float32),
        grid=(num_tiles,),
        in_specs=[
            pl.BlockSpec((tm_eff, 128), lambda i: (i, 0)),
            pl.BlockSpec((tm_eff, 128), lambda i: (i, 0)),
            pl.BlockSpec((128, 128), lambda i: (0, 0)),
        ],
        out_specs=pl.BlockSpec((1, 1, 128), lambda i: (i, 0, 0)),
        compiler_params=pltpu.CompilerParams(
            dimension_semantics=("parallel",),
            vmem_limit_bytes=vmem_limit,
        ),
    )(yt2, yp2, sel)

    # Each original row's IOU is repeated `seg` times across its lanes.
    total_iou = jnp.sum(partials, dtype=jnp.float32) / jnp.float32(seg)
    loss = (total_iou - jnp.float32(m)) / jnp.float32(m)   # == -mean(1 - IOU)
    return loss.astype(out_dtype)


def iou_loss_ref(y_true, y_pred):
    inter = jnp.sum(jnp.abs(y_true * y_pred), axis=-1)
    union = jnp.sum(y_true, axis=-1) + jnp.sum(y_pred, axis=-1) - inter
    iou = inter / union
    return -jnp.mean(1.0 - iou)


if __name__ == "__main__":
    key = jax.random.PRNGKey(0)
    k1, k2 = jax.random.split(key)
    # NCHW: batch=2, channels=4, spatial=16x16; mask/probability-like values.
    y_true = jax.random.uniform(k1, (2, 4, 16, 16), dtype=jnp.float32)
    y_pred = jax.random.uniform(k2, (2, 4, 16, 16), dtype=jnp.float32)

    loss = iou_loss_pallas(y_true, y_pred)
    jax.block_until_ready(loss)

    ref = iou_loss_ref(y_true, y_pred)
    assert jnp.allclose(loss, ref, rtol=1e-3, atol=1e-6), (loss, ref)
    print("KERNEL_OK")
</pallas_src>

<mosaic_0001>
module attributes {stable_mosaic.version = 11 : i64} {
  func.func @_iou_loss_kernel(%arg0: i32, %arg1: memref<8x128xf32, #tpu.memory_space<vmem>>, %arg2: memref<8x128xf32, #tpu.memory_space<vmem>>, %arg3: memref<128x128xf32, #tpu.memory_space<vmem>>, %arg4: memref<1x1x128xf32, #tpu.memory_space<vmem>>) attributes {dimension_semantics = [#tpu.dimension_semantics<parallel>], iteration_bounds = array<i64: 2>, scalar_prefetch = 0 : i64, scratch_operands = 0 : i64, tpu.core_type = #tpu.core_type<tc>, window_params = [{transform_indices = @transform_0, window_bounds = array<i64: 8, 128>}, {transform_indices = @transform_1, window_bounds = array<i64: 8, 128>}, {pipeline_mode = #tpu.pipeline_mode<synchronous>, transform_indices = @transform_2, window_bounds = array<i64: 128, 128>}, {transform_indices = @transform_3, window_bounds = array<i64: 1, 1, 128>}]} {
    %c0 = arith.constant 0 : index
    %c0_0 = arith.constant 0 : index
    %0 = vector.load %arg1[%c0, %c0_0] : memref<8x128xf32, #tpu.memory_space<vmem>>, vector<8x128xf32>
    %c0_1 = arith.constant 0 : index
    %c0_2 = arith.constant 0 : index
    %1 = vector.load %arg2[%c0_1, %c0_2] : memref<8x128xf32, #tpu.memory_space<vmem>>, vector<8x128xf32>
    %c0_3 = arith.constant 0 : index
    %c0_4 = arith.constant 0 : index
    %2 = vector.load %arg3[%c0_3, %c0_4] : memref<128x128xf32, #tpu.memory_space<vmem>>, vector<128x128xf32>
    %3 = arith.mulf %0, %1 : vector<8x128xf32>
    %4 = math.absf %3 : vector<8x128xf32>
    %cst = arith.constant dense<0.000000e+00> : vector<8x128xf32>
    %5 = tpu.matmul %4, %2, %cst {dimension_numbers = #tpu.dot_dimension_numbers<[1], [0], [0], [1], [0, 0, 1, 1], [], []>} : vector<8x128xf32>, vector<128x128xf32>, vector<8x128xf32> -> vector<8x128xf32>
    %6 = arith.addf %0, %1 : vector<8x128xf32>
    %cst_5 = arith.constant dense<0.000000e+00> : vector<8x128xf32>
    %7 = tpu.matmul %6, %2, %cst_5 {dimension_numbers = #tpu.dot_dimension_numbers<[1], [0], [0], [1], [0, 0, 1, 1], [], []>} : vector<8x128xf32>, vector<128x128xf32>, vector<8x128xf32> -> vector<8x128xf32>
    %8 = arith.subf %7, %5 : vector<8x128xf32>
    %9 = tpu.reciprocal %8 {approx = true} : vector<8x128xf32> -> vector<8x128xf32>
    %10 = arith.mulf %5, %9 : vector<8x128xf32>
    %c8_i32 = arith.constant 8 : i32
    %11 = arith.muli %arg0, %c8_i32 : i32
    %12 = tpu.iota {dimensions = array<i32: 0>} : vector<8x1xi32>
    %13 = vector.broadcast %11 : i32 to vector<8x1xi32>
    %14 = arith.addi %13, %12 : vector<8x1xi32>
    %c16_i32 = arith.constant 16 : i32
    %15 = vector.broadcast %c16_i32 : i32 to vector<8x1xi32>
    %16 = arith.cmpi slt, %14, %15 : vector<8x1xi32>
    %cst_6 = arith.constant 0.000000e+00 : f32
    %17 = vector.shape_cast %16 : vector<8x1xi1> to vector<8x1xi1>
    %18 = vector.broadcast %17 : vector<8x1xi1> to vector<8x128xi1>
    %19 = vector.broadcast %cst_6 : f32 to vector<8x128xf32>
    %20 = arith.select %18, %10, %19 : vector<8x128xi1>, vector<8x128xf32>
    %cst_7 = arith.constant dense<0.000000e+00> : vector<128xf32>
    %21 = vector.multi_reduction <add>, %20, %cst_7 [0] : vector<8x128xf32> to vector<128xf32>
    %22 = vector.shape_cast %21 : vector<128xf32> to vector<1x1x128xf32>
    %c0_8 = arith.constant 0 : index
    %c0_9 = arith.constant 0 : index
    %c0_10 = arith.constant 0 : index
    %23 = vector.load %arg4[%c0_8, %c0_9, %c0_10] : memref<1x1x128xf32, #tpu.memory_space<vmem>>, vector<1x1x128xf32>
    tpu.vector_store %arg4[%c0_8, %c0_9, %c0_10], %22 {strides = array<i32>} : memref<1x1x128xf32, #tpu.memory_space<vmem>>, vector<1x1x128xf32>,
    return
  }
  func.func @transform_0(%arg0: i32) -> (i32, i32) {
    %c0_i32 = arith.constant 0 : i32
    %c0_i32_0 = arith.constant 0 : i32
    return %arg0, %c0_i32 : i32, i32
  }
  func.func @transform_1(%arg0: i32) -> (i32, i32) {
    %c0_i32 = arith.constant 0 : i32
    %c0_i32_0 = arith.constant 0 : i32
    return %arg0, %c0_i32 : i32, i32
  }
  func.func @transform_2(%arg0: i32) -> (i32, i32) {
    %c0_i32 = arith.constant 0 : i32
    %c0_i32_0 = arith.constant 0 : i32
    %c0_i32_1 = arith.constant 0 : i32
    return %c0_i32, %c0_i32_0 : i32, i32
  }
  func.func @transform_3(%arg0: i32) -> (i32, i32, i32) {
    %c0_i32 = arith.constant 0 : i32
    %c0_i32_0 = arith.constant 0 : i32
    %c0_i32_1 = arith.constant 0 : i32
    return %arg0, %c0_i32, %c0_i32_0 : i32, i32, i32
  }
}

</mosaic_0001>

<llo_original>
// kernel: tpu_custom_call.1
$region0: #{tpu_custom_call.1}
  #allocation0 [shape = 'u32[]', space=smem, size = 0x4, offset = 0x4, fixed_abs, tag = 'smem constant byte address 0x4 - core index']
  #allocation1 [shape = 'u32[144,128]{1,0:T(1,128)}', space=vmem, size = 0x12000, scoped, tag = 'internal scratch']
  %s0 = inlined_call_operand.hbm [shape: f32[16,128], index: 0, kind: input, shape index: {}]
  %s1 = inlined_call_operand.hbm [shape: f32[16,128], index: 1, kind: input, shape index: {}]
  %s2 = inlined_call_operand.hbm [shape: f32[128,128], index: 2, kind: input, shape index: {}]
  %s3 = inlined_call_operand.hbm [shape: f32[2,1,128], index: 3, kind: output, shape index: {}]
  %s4 = sld [smem:[#allocation0]]
  $region57: #{tpu_custom_call.1} parent=0
    _
  %s6 = ssub.s32 1, %s4
  %s7 = scalar_select 0, %s6, %s4
  $region1: #{tpu_custom_call.1} parent=0
    #allocation2 [shape = 'u8[8192]{0}', space=vmem, size = 0x2000, scoped, tag = 'input window, operand 0']
    #allocation3 [shape = 's32[2]{0}', space=sflag, size = 0x8, scoped, tag = 'scoped memory for tpu_custom_call.1']
    #allocation4 [shape = 's32[2]{0}', space=sflag, size = 0x8, scoped, tag = 'scoped memory for tpu_custom_call.1']
    #allocation5 [shape = 'u8[8192]{0}', space=vmem, size = 0x2000, scoped, tag = 'input window, operand 1']
    #allocation6 [shape = 's32[2]{0}', space=sflag, size = 0x8, scoped, tag = 'scoped memory for tpu_custom_call.1']
    #allocation7 [shape = 'u8[65536]{0}', space=vmem, size = 0x10000, scoped, tag = 'input window, operand 2, single buffered']
    #allocation8 [shape = 'u8[1024]{0}', space=vmem, size = 0x400, scoped, tag = 'output window, operand 0']
    %8 = vsyncpa [#allocation3], 0
    %s9 = scalar_lea.sflag [#allocation3], 1
    %10 = vsyncpa %s9, 0
    %11 = vsyncpa [#allocation6], 0
    %s12 = scalar_lea.sflag [#allocation6], 1
    %13 = vsyncpa %s12, 0
    %14 = vsyncpa [#allocation4], 0
    %s15 = scalar_lea.sflag [#allocation4], 1
    %16 = vsyncpa %s15, 0
    loop: start=0, step=1, limit=4
    $region2: #{tpu_custom_call.1} parent=1 // loop_pre_header
      _
    $region3: #{tpu_custom_call.1} parent=1 // loop_header
      %s18 = sphi 0, %s22
      %p19 = scmp.ge.s32.totalorder %s18, 4
      %s28 = sphi 0, %s30
      %s31 = sphi 0, %s28
      %s32 = sphi 0, %s31
      %s48 = sphi 0, %s32
      %s54 = sphi 0, %s56
      %s57 = sphi 0, %s54
      %s58 = sphi 0, %s57
      %s74 = sphi 0, %s58
      %s78 = sphi 0, %s78
      %s80 = sphi 0, %s78
      %s81 = sphi 0, %s80
      %s95 = sphi 0, %s81
      %s101 = sphi 0, %s103
      %s104 = sphi 0, %s101
      %s105 = sphi 0, %s104
      %s121 = sphi 0, %s105
    $region4: #{tpu_custom_call.1} parent=1 // loop_header_branch
      %21 = sbr.rel (%p19) target = $region8
    $region5: #{tpu_custom_call.1} parent=1 // loop_body
      %s23 = ssub.s32 %s18, 1
      %s24 = ssub.s32 %s18, 2
      %s25 = sadd.s32 %s18, 1
      %s26 = ssub.s32 %s18, %s25
      %p27 = scmp.eq.s32.totalorder %s26, 0
      %s29 = sadd.s32 %s28, 1
      %s30 = scalar_select %p27, %s28, %s29
      %p33 = pneg %p27
      %p34 = scmp.eq.s32.totalorder %s18, 1
      %p35 = por %p33, %p34
      %p36 = scmp.ne.s32.totalorder %s28, %s31
      %p37 = scmp.eq.s32.totalorder %s18, 0
      %p38 = por %p36, %p37
      %p39 = scmp.ne.s32.totalorder %s28, %s31
      %p40 = scmp.eq.s32.totalorder %s23, 1
      %p41 = por %p39, %p40
      %p42 = scmp.ne.s32.totalorder %s31, %s32
      %p43 = scmp.eq.s32.totalorder %s23, 0
      %p44 = por %p42, %p43
      %p45 = scmp.ne.s32.totalorder %s31, %s32
      %p46 = scmp.eq.s32.totalorder %s24, 1
      %p47 = por %p45, %p46
      %p49 = scmp.ne.s32.totalorder %s32, %s48
      %p50 = scmp.eq.s32.totalorder %s24, 0
      %p51 = por %p49, %p50
      %s52 = ssub.s32 %s18, %s25
      %p53 = scmp.eq.s32.totalorder %s52, 0
      %s55 = sadd.s32 %s54, 1
      %s56 = scalar_select %p53, %s54, %s55
      %p59 = pneg %p53
      %p60 = scmp.eq.s32.totalorder %s18, 1
      %p61 = por %p59, %p60
      %p62 = scmp.ne.s32.totalorder %s54, %s57
      %p63 = scmp.eq.s32.totalorder %s18, 0
      %p64 = por %p62, %p63
      %p65 = scmp.ne.s32.totalorder %s54, %s57
      %p66 = scmp.eq.s32.totalorder %s23, 1
      %p67 = por %p65, %p66
      %p68 = scmp.ne.s32.totalorder %s57, %s58
      %p69 = scmp.eq.s32.totalorder %s23, 0
      %p70 = por %p68, %p69
      %p71 = scmp.ne.s32.totalorder %s57, %s58
      %p72 = scmp.eq.s32.totalorder %s24, 1
      %p73 = por %p71, %p72
      %p75 = scmp.ne.s32.totalorder %s58, %s74
      %p76 = scmp.eq.s32.totalorder %s24, 0
      %p77 = por %p75, %p76
      %s79 = sadd.s32 %s78, 1
      %p82 = scmp.eq.s32.totalorder %s18, 1
      %p83 = scmp.ne.s32.totalorder %s78, %s80
      %p84 = scmp.eq.s32.totalorder %s18, 0
      %p85 = por %p83, %p84
      %p86 = scmp.ne.s32.totalorder %s78, %s80
      %p87 = scmp.eq.s32.totalorder %s23, 1
      %p88 = por %p86, %p87
      %p89 = scmp.ne.s32.totalorder %s80, %s81
      %p90 = scmp.eq.s32.totalorder %s23, 0
      %p91 = por %p89, %p90
      %p92 = scmp.ne.s32.totalorder %s80, %s81
      %p93 = scmp.eq.s32.totalorder %s24, 1
      %p94 = por %p92, %p93
      %p96 = scmp.ne.s32.totalorder %s81, %s95
      %p97 = scmp.eq.s32.totalorder %s24, 0
      %p98 = por %p96, %p97
      %s99 = ssub.s32 %s18, %s25
      %p100 = scmp.eq.s32.totalorder %s99, 0
      %s102 = sadd.s32 %s101, 1
      %s103 = scalar_select %p100, %s101, %s102
      %p106 = pneg %p100
      %p107 = scmp.eq.s32.totalorder %s18, 1
      %p108 = por %p106, %p107
      %p109 = scmp.ne.s32.totalorder %s101, %s104
      %p110 = scmp.eq.s32.totalorder %s18, 0
      %p111 = por %p109, %p110
      %p112 = scmp.ne.s32.totalorder %s101, %s104
      %p113 = scmp.eq.s32.totalorder %s23, 1
      %p114 = por %p112, %p113
      %p115 = scmp.ne.s32.totalorder %s104, %s105
      %p116 = scmp.eq.s32.totalorder %s23, 0
      %p117 = por %p115, %p116
      %p118 = scmp.ne.s32.totalorder %s104, %s105
      %p119 = scmp.eq.s32.totalorder %s24, 1
      %p120 = por %p118, %p119
      %p122 = scmp.ne.s32.totalorder %s105, %s121
      %p123 = scmp.eq.s32.totalorder %s24, 0
      %p124 = por %p122, %p123
      %p125 = scmp.le.s32.totalorder 1, %s18
      %p126 = scmp.lt.s32.totalorder %s18, 3
      %p127 = pnand %p125, %p126
      %p128 = pneg %p127
      // Predicated region
      $region9: #{tpu_custom_call.1} parent=5 // pred_check
        _
      $region10: #{tpu_custom_call.1} parent=5 // pred_check_branch
        %130 = sbr.rel (%p127) target = $region12
      $region11: #{tpu_custom_call.1} parent=5 // pred_region
        %s131 = ssub.s32 %s18, 1
        // Predicated region
        $region13: #{tpu_custom_call.1} parent=11 // pred_check
          %p132 = pneg %p91
        $region14: #{tpu_custom_call.1} parent=11 // pred_check_branch
          %134 = sbr.rel (%p132) target = $region16
        $region15: #{tpu_custom_call.1} parent=11 // pred_region
          %s136 = ssub.s32 2048, 2048
          %137 = vsyncadd [#allocation6], %s136
          %s138 = sshll.u32 [#allocation7], 4
          %s139 = int_to_ptr.vmem [resolvable:$true] %s138
          %144 = dma.hbm_to_vmem [thread:$0]  %s2, 2048, %s139, [#allocation6], 128, 128, 8
        $region16: #{tpu_custom_call.1} parent=11 // pred_fallthru
          _
      $region12: #{tpu_custom_call.1} parent=5 // pred_fallthru
        _
      %p145 = scmp.lt.s32.totalorder %s18, 2
      // Predicated region
      $region17: #{tpu_custom_call.1} parent=5 // pred_check
        %p146 = pneg %p145
      $region18: #{tpu_custom_call.1} parent=5 // pred_check_branch
        %148 = sbr.rel (%p146) target = $region20
      $region19: #{tpu_custom_call.1} parent=5 // pred_region
        // Predicated region
        $region21: #{tpu_custom_call.1} parent=19 // pred_check
          %p149 = pneg %p38
        $region22: #{tpu_custom_call.1} parent=19 // pred_check_branch
          %151 = sbr.rel (%p149) target = $region24
        $region23: #{tpu_custom_call.1} parent=19 // pred_region
          %s152 = sand.u32 %s28, 1
          %s153 = scalar_lea.sflag [#allocation3], %s152
          %s154 = sand.u32 %s28, 1
          %s155 = smul.addr %s154, 8
          %s156 = scalar_lea.vmem [#allocation2], %s155
          %s158 = ssub.s32 128, 128
          %159 = vsyncadd %s153, %s158
          %s160 = smul.addr %s18, 128
          %s161 = scalar_lea.hbm %s0, %s160
          %s163 = sshll.u32 %s156, 4
          %s164 = int_to_ptr.vmem [resolvable:$true] %s163
          %166 = dma.hbm_to_vmem [thread:$0]  %s161, 128, %s164, %s153
        $region24: #{tpu_custom_call.1} parent=19 // pred_fallthru
          _
        // Predicated region
        $region25: #{tpu_custom_call.1} parent=19 // pred_check
          %p167 = pneg %p64
        $region26: #{tpu_custom_call.1} parent=19 // pred_check_branch
          %169 = sbr.rel (%p167) target = $region28
        $region27: #{tpu_custom_call.1} parent=19 // pred_region
          %s170 = sand.u32 %s18, 1
          %s171 = scalar_lea.sflag [#allocation6], %s170
          %s172 = sand.u32 %s54, 1
          %s173 = smul.addr %s172, 8
          %s174 = scalar_lea.vmem [#allocation5], %s173
          %s176 = ssub.s32 128, 128
          %177 = vsyncadd %s171, %s176
          %s178 = smul.addr %s18, 128
          %s179 = scalar_lea.hbm %s1, %s178
          %s181 = sshll.u32 %s174, 4
          %s182 = int_to_ptr.vmem [resolvable:$true] %s181
          %184 = dma.hbm_to_vmem [thread:$0]  %s179, 128, %s182, %s171
        $region28: #{tpu_custom_call.1} parent=19 // pred_fallthru
          _
      $region20: #{tpu_custom_call.1} parent=5 // pred_fallthru
        _
      %p185 = scmp.le.s32.totalorder 1, %s18
      %p186 = scmp.lt.s32.totalorder %s18, 3
      %p187 = pnand %p185, %p186
      %p188 = pneg %p187
      // Predicated region
      $region29: #{tpu_custom_call.1} parent=5 // pred_check
        _
      $region30: #{tpu_custom_call.1} parent=5 // pred_check_branch
        %190 = sbr.rel (%p187) target = $region32
      $region31: #{tpu_custom_call.1} parent=5 // pred_region
        %s191 = ssub.s32 %s18, 1
        %s192 = sand.u32 %s31, 1
        %s193 = scalar_lea.sflag [#allocation3], %s192
        %s194 = sand.u32 %s31, 1
        %s195 = smul.addr %s194, 8
        %s196 = scalar_lea.vmem [#allocation2], %s195
        // Predicated region
        $region33: #{tpu_custom_call.1} parent=31 // pred_check
          %p197 = pneg %p44
        $region34: #{tpu_custom_call.1} parent=31 // pred_check_branch
          %199 = sbr.rel (%p197) target = $region36
        $region35: #{tpu_custom_call.1} parent=31 // pred_region
          %200 = dma.done %s193, 128
        $region36: #{tpu_custom_call.1} parent=31 // pred_fallthru
          _
        %s201 = sand.u32 %s23, 1
        %s202 = scalar_lea.sflag [#allocation6], %s201
        %s203 = sand.u32 %s57, 1
        %s204 = smul.addr %s203, 8
        %s205 = scalar_lea.vmem [#allocation5], %s204
        // Predicated region
        $region37: #{tpu_custom_call.1} parent=31 // pred_check
          %p206 = pneg %p70
        $region38: #{tpu_custom_call.1} parent=31 // pred_check_branch
          %208 = sbr.rel (%p206) target = $region40
        $region39: #{tpu_custom_call.1} parent=31 // pred_region
          %209 = dma.done %s202, 128
        $region40: #{tpu_custom_call.1} parent=31 // pred_fallthru
          _
        // Predicated region
        $region41: #{tpu_custom_call.1} parent=31 // pred_check
          %p210 = pneg %p91
        $region42: #{tpu_custom_call.1} parent=31 // pred_check_branch
          %212 = sbr.rel (%p210) target = $region44
        $region43: #{tpu_custom_call.1} parent=31 // pred_region
          %213 = dma.done [#allocation6], 2048
        $region44: #{tpu_custom_call.1} parent=31 // pred_fallthru
          _
        %s214 = sand.u32 %s31, 1
        %s215 = scalar_lea.sflag [#allocation3], %s214
        %s216 = sand.u32 %s31, 1
        %s217 = smul.addr %s216, 8
        %s218 = scalar_lea.vmem [#allocation2], %s217
        %p219 = pneg %p44
        %p220 = pneg %p41
        %s221 = sand.u32 %s23, 1
        %s222 = scalar_lea.sflag [#allocation6], %s221
        %s223 = sand.u32 %s57, 1
        %s224 = smul.addr %s223, 8
        %s225 = scalar_lea.vmem [#allocation5], %s224
        %p226 = pneg %p70
        %p227 = pneg %p67
        %p228 = pneg %p91
        %p229 = pneg %p88
        %p230 = pneg %p117
        %p231 = pneg %p114
        %s232 = sand.u32 %s104, 1
        %s233 = scalar_lea.sflag [#allocation4], %s232
        %s234 = sand.u32 %s104, 1
        %s235 = scalar_lea.vmem [#allocation8], %s234
        %v236 = vld [vmem:[%s196] sm:$0xff]
        %v237 = vld [vmem:[%s205] sm:$0xff]
        %v238 = vld [vmem:[#allocation7] sm:$0xff]
        %v239 = vld [vmem:[#allocation7 + $0x8] sm:$0xff]
        %v240 = vld [vmem:[#allocation7 + $0x10] sm:$0xff]
        %v241 = vld [vmem:[#allocation7 + $0x18] sm:$0xff]
        %v242 = vld [vmem:[#allocation7 + $0x20] sm:$0xff]
        %v243 = vld [vmem:[#allocation7 + $0x28] sm:$0xff]
        %v244 = vld [vmem:[#allocation7 + $0x30] sm:$0xff]
        %v245 = vld [vmem:[#allocation7 + $0x38] sm:$0xff]
        %v246 = vld [vmem:[#allocation7 + $0x40] sm:$0xff]
        %v247 = vld [vmem:[#allocation7 + $0x48] sm:$0xff]
        %v248 = vld [vmem:[#allocation7 + $0x50] sm:$0xff]
        %v249 = vld [vmem:[#allocation7 + $0x58] sm:$0xff]
        %v250 = vld [vmem:[#allocation7 + $0x60] sm:$0xff]
        %v251 = vld [vmem:[#allocation7 + $0x68] sm:$0xff]
        %v252 = vld [vmem:[#allocation7 + $0x70] sm:$0xff]
        %v253 = vld [vmem:[#allocation7 + $0x78] sm:$0xff]
        %v254 = vmul.f32 %v236, %v237
        %v255 = vand.u32 2147483647, %v254
        %256 = vmatprep.subr.mxu0 0.0
        %257 = vmatpush1.msra.mxu0 %v238
        %258 = vmatprep.subr.mxu0 0.0
        %259 = vmatpush1.msra.mxu0 %v239
        %260 = vmatprep.subr.mxu0 0.0
        %261 = vmatpush1.msra.mxu0 %v240
        %262 = vmatprep.subr.mxu0 0.0
        %263 = vmatpush1.msra.mxu0 %v241
        %264 = vmatprep.subr.mxu0 0.0
        %265 = vmatpush1.msra.mxu0 %v242
        %266 = vmatprep.subr.mxu0 0.0
        %267 = vmatpush1.msra.mxu0 %v243
        %268 = vmatprep.subr.mxu0 0.0
        %269 = vmatpush1.msra.mxu0 %v244
        %270 = vmatprep.subr.mxu0 0.0
        %271 = vmatpush1.msra.mxu0 %v245
        %272 = vmatprep.subr.mxu0 0.0
        %273 = vmatpush1.msra.mxu0 %v246
        %274 = vmatprep.subr.mxu0 0.0
        %275 = vmatpush1.msra.mxu0 %v247
        %276 = vmatprep.subr.mxu0 0.0
        %277 = vmatpush1.msra.mxu0 %v248
        %278 = vmatprep.subr.mxu0 0.0
        %279 = vmatpush1.msra.mxu0 %v249
        %280 = vmatprep.subr.mxu0 0.0
        %281 = vmatpush1.msra.mxu0 %v250
        %282 = vmatprep.subr.mxu0 0.0
        %283 = vmatpush1.msra.mxu0 %v251
        %284 = vmatprep.subr.mxu0 0.0
        %285 = vmatpush1.msra.mxu0 %v252
        %286 = vmatprep.subr.mxu0 0.0
        %287 = vmatpush1.msra.mxu0 %v253
        %288 = vmatprep.subr.mxu0 0.0
        %289 = vmatpush1.msra.mxu0 0.0
        %290 = vmatprep.subr.mxu0 0.0
        %291 = vmatpush1.msra.mxu0 0.0
        %292 = vmatprep.subr.mxu0 0.0
        %293 = vmatpush1.msra.mxu0 0.0
        %294 = vmatprep.subr.mxu0 0.0
        %295 = vmatpush1.msra.mxu0 0.0
        %296 = vmatprep.subr.mxu0 0.0
        %297 = vmatpush1.msra.mxu0 0.0
        %298 = vmatprep.subr.mxu0 0.0
        %299 = vmatpush1.msra.mxu0 0.0
        %300 = vmatprep.subr.mxu0 0.0
        %301 = vmatpush1.msra.mxu0 0.0
        %302 = vmatprep.subr.mxu0 0.0
        %303 = vmatpush1.msra.mxu0 0.0
        %304 = vmatprep.subr.mxu0 0.0
        %305 = vmatpush1.msra.mxu0 0.0
        %306 = vmatprep.subr.mxu0 0.0
        %307 = vmatpush1.msra.mxu0 0.0
        %308 = vmatprep.subr.mxu0 0.0
        %309 = vmatpush1.msra.mxu0 0.0
        %310 = vmatprep.subr.mxu0 0.0
        %311 = vmatpush1.msra.mxu0 0.0
        %312 = vmatprep.subr.mxu0 0.0
        %313 = vmatpush1.msra.mxu0 0.0
        %314 = vmatprep.subr.mxu0 0.0
        %315 = vmatpush1.msra.mxu0 0.0
        %316 = vmatprep.subr.mxu0 0.0
        %317 = vmatpush1.msra.mxu0 0.0
        %318 = vmatprep.subr.mxu0 0.0
        %319 = vmatpush1.msra.mxu0 0.0
        %320 = vmatprep.mubr.f32.mxu0 0.0
        %321 = vmatmul.mubr.f32.gmra.mrb[0].mxu0 %v255
        %v322 = vpop.f32.mrb[0].mxu0
        %v323 = vadd.f32 0.0, %v322
        %v324 = vpop.f32.mrb[0].mxu0
        %325 = vdwg.mxu0
        %v326 = vadd.f32 %v236, %v237
        %327 = vmatprep.subr.mxu0 0.0
        %328 = vmatpush1.msra.mxu0 %v238
        %329 = vmatprep.subr.mxu0 0.0
        %330 = vmatpush1.msra.mxu0 %v239
        %331 = vmatprep.subr.mxu0 0.0
        %332 = vmatpush1.msra.mxu0 %v240
        %333 = vmatprep.subr.mxu0 0.0
        %334 = vmatpush1.msra.mxu0 %v241
        %335 = vmatprep.subr.mxu0 0.0
        %336 = vmatpush1.msra.mxu0 %v242
        %337 = vmatprep.subr.mxu0 0.0
        %338 = vmatpush1.msra.mxu0 %v243
        %339 = vmatprep.subr.mxu0 0.0
        %340 = vmatpush1.msra.mxu0 %v244
        %341 = vmatprep.subr.mxu0 0.0
        %342 = vmatpush1.msra.mxu0 %v245
        %343 = vmatprep.subr.mxu0 0.0
        %344 = vmatpush1.msra.mxu0 %v246
        %345 = vmatprep.subr.mxu0 0.0
        %346 = vmatpush1.msra.mxu0 %v247
        %347 = vmatprep.subr.mxu0 0.0
        %348 = vmatpush1.msra.mxu0 %v248
        %349 = vmatprep.subr.mxu0 0.0
        %350 = vmatpush1.msra.mxu0 %v249
        %351 = vmatprep.subr.mxu0 0.0
        %352 = vmatpush1.msra.mxu0 %v250
        %353 = vmatprep.subr.mxu0 0.0
        %354 = vmatpush1.msra.mxu0 %v251
        %355 = vmatprep.subr.mxu0 0.0
        %356 = vmatpush1.msra.mxu0 %v252
        %357 = vmatprep.subr.mxu0 0.0
        %358 = vmatpush1.msra.mxu0 %v253
        %359 = vmatprep.subr.mxu0 0.0
        %360 = vmatpush1.msra.mxu0 0.0
        %361 = vmatprep.subr.mxu0 0.0
        %362 = vmatpush1.msra.mxu0 0.0
        %363 = vmatprep.subr.mxu0 0.0
        %364 = vmatpush1.msra.mxu0 0.0
        %365 = vmatprep.subr.mxu0 0.0
        %366 = vmatpush1.msra.mxu0 0.0
        %367 = vmatprep.subr.mxu0 0.0
        %368 = vmatpush1.msra.mxu0 0.0
        %369 = vmatprep.subr.mxu0 0.0
        %370 = vmatpush1.msra.mxu0 0.0
        %371 = vmatprep.subr.mxu0 0.0
        %372 = vmatpush1.msra.mxu0 0.0
        %373 = vmatprep.subr.mxu0 0.0
        %374 = vmatpush1.msra.mxu0 0.0
        %375 = vmatprep.subr.mxu0 0.0
        %376 = vmatpush1.msra.mxu0 0.0
        %377 = vmatprep.subr.mxu0 0.0
        %378 = vmatpush1.msra.mxu0 0.0
        %379 = vmatprep.subr.mxu0 0.0
        %380 = vmatpush1.msra.mxu0 0.0
        %381 = vmatprep.subr.mxu0 0.0
        %382 = vmatpush1.msra.mxu0 0.0
        %383 = vmatprep.subr.mxu0 0.0
        %384 = vmatpush1.msra.mxu0 0.0
        %385 = vmatprep.subr.mxu0 0.0
        %386 = vmatpush1.msra.mxu0 0.0
        %387 = vmatprep.subr.mxu0 0.0
        %388 = vmatpush1.msra.mxu0 0.0
        %389 = vmatprep.subr.mxu0 0.0
        %390 = vmatpush1.msra.mxu0 0.0
        %391 = vmatprep.mubr.f32.mxu0 0.0
        %392 = vmatmul.mubr.f32.gmra.mrb[0].mxu0 %v326
        %v393 = vpop.f32.mrb[0].mxu0
        %v394 = vadd.f32 0.0, %v393
        %v395 = vpop.f32.mrb[0].mxu0
        %396 = vdwg.mxu0
        %v397 = vsub.f32 %v394, %v323
        %v398 = vrcp.pop %v397
        %v399 = vmul.f32 %v323, %v398
        %s400 = smul.u32 %s23, 8
        %v401 = vlaneseq
        %v402 = vshrl.u32 %v401, 7
        %v403 = vstv %s400
        %v404 = vadd.s32 %v403, %v402
        %vm405 = vcmp.lt.s32.totalorder %v404, 16
        %v406 = vsel %vm405, 1, 0
        %vm407 = vcmp.eq.s32.totalorder %v406, 1
        %v408 = vsel %vm407, %v399, 0.0
        %v409 = vrot.slane %v408, 4
        %v410 = vadd.f32 %v408, %v409
        %v411 = vrot.slane %v410, 2
        %v412 = vadd.f32 %v410, %v411
        %v413 = vrot.slane %v412, 1
        %v414 = vadd.f32 %v412, %v413
        %415 = vst [vmem:[%s235] sm:$0x1] %v414
        %s416 = sand.u32 %s104, 1
        %s417 = scalar_lea.sflag [#allocation4], %s416
        %s418 = sand.u32 %s104, 1
        %s419 = scalar_lea.vmem [#allocation8], %s418
        // Predicated region
        $region45: #{tpu_custom_call.1} parent=31 // pred_check
          %p420 = pneg %p114
        $region46: #{tpu_custom_call.1} parent=31 // pred_check_branch
          %422 = sbr.rel (%p420) target = $region48
        $region47: #{tpu_custom_call.1} parent=31 // pred_region
          %s424 = ssub.s32 16, 16
          %425 = vsyncadd %s417, %s424
          %s426 = smul.addr %s23, 16
          %s427 = scalar_lea.hbm %s3, %s426
          %s429 = sshll.u32 %s419, 4
          %s430 = int_to_ptr.vmem [resolvable:$true] %s429
          %432 = dma.vmem_to_hbm [thread:$0]  %s430, 16, %s427, %s417
        $region48: #{tpu_custom_call.1} parent=31 // pred_fallthru
          _
      $region32: #{tpu_custom_call.1} parent=5 // pred_fallthru
        _
      %p433 = scmp.le.s32.totalorder 2, %s18
      // Predicated region
      $region49: #{tpu_custom_call.1} parent=5 // pred_check
        %p434 = pneg %p433
      $region50: #{tpu_custom_call.1} parent=5 // pred_check_branch
        %436 = sbr.rel (%p434) target = $region52
      $region51: #{tpu_custom_call.1} parent=5 // pred_region
        %s437 = ssub.s32 %s18, 2
        // Predicated region
        $region53: #{tpu_custom_call.1} parent=51 // pred_check
          %p438 = pneg %p120
        $region54: #{tpu_custom_call.1} parent=51 // pred_check_branch
          %440 = sbr.rel (%p438) target = $region56
        $region55: #{tpu_custom_call.1} parent=51 // pred_region
          %s441 = sand.u32 %s105, 1
          %s442 = scalar_lea.sflag [#allocation4], %s441
          %s443 = sand.u32 %s105, 1
          %s444 = scalar_lea.vmem [#allocation8], %s443
          %445 = dma.done %s442, 16
        $region56: #{tpu_custom_call.1} parent=51 // pred_fallthru
          _
      $region52: #{tpu_custom_call.1} parent=5 // pred_fallthru
        _
    $region6: #{tpu_custom_call.1} parent=1 // loop_footer
      %s22 = sadd.s32 1, %s18
    $region7: #{tpu_custom_call.1} parent=1 // loop_footer_branch
      %17 = sbr.rel target = $region3
    $region8: #{tpu_custom_call.1} parent=1 // loop_exit
      _
    %446 = vsyncpa [#allocation3], 1
    %s447 = scalar_lea.sflag [#allocation3], 1
    %448 = vsyncpa %s447, 1
    %449 = vsyncpa [#allocation6], 1
    %s450 = scalar_lea.sflag [#allocation6], 1
    %451 = vsyncpa %s450, 1
    %452 = vsyncpa [#allocation4], 1
    %s453 = scalar_lea.sflag [#allocation4], 1
    %454 = vsyncpa %s453, 1

</llo_original>
